<compile_context>
chip_gen: v6e
topology: v6e:2x2x1
jax: 0.10.0
libtpu: 0.0.40
codegen_flags: <defaults>
</compile_context>

<pallas_src>
import functools

import jax
import jax.numpy as jnp
from jax.experimental import pallas as pl
from jax.experimental.pallas import tpu as pltpu

_LANE = 128
_SUBLANE = 8


def _sq_diff_sum_kernel(y_ref, d_ref, o_ref, *, kernel_rows, block_rows,
                        acc_rows, blocks_per_core, num_cores, need_row_mask):
    c = pl.program_id(0)   # core-split axis  ("parallel")
    j = pl.program_id(1)   # reduction axis   ("arbitrary")

    # Zero this core's resident (acc_rows, 8, 128) accumulator on its 1st step.
    @pl.when(j == 0)
    def _():
        o_ref[...] = jnp.zeros_like(o_ref)

    groups = block_rows // (acc_rows * _SUBLANE)

    def _accumulate(mask_rows):
        diff = y_ref[...].astype(jnp.float32) - d_ref[...].astype(jnp.float32)
        sq = diff * diff
        if mask_rows:
            # Only the final (partial) block: zero rows beyond the true count.
            base = (c * blocks_per_core + j) * block_rows
            row_ids = base + jax.lax.broadcasted_iota(
                jnp.int32, (block_rows, _LANE), 0)
            sq = jnp.where(row_ids < kernel_rows, sq, 0.0)
        # Partial-reduce across vreg groups only (pure VPU adds, hidden under
        # DMA).  acc_rows independent slabs keep several add chains in flight;
        # all cross-lane/XLU work is deferred to the wrapper.
        o_ref[...] += jnp.sum(
            sq.reshape(groups, acc_rows, _SUBLANE, _LANE), axis=0)

    if need_row_mask:
        is_last = jnp.logical_and(c == num_cores - 1, j == blocks_per_core - 1)

        @pl.when(jnp.logical_not(is_last))
        def _():
            _accumulate(False)

        @pl.when(is_last)
        def _():
            _accumulate(True)
    else:
        _accumulate(False)


def _tpu_defaults():
    """(num_cores, block_rows) per TPU generation; conservative fallback."""
    kind = ""
    try:
        kind = jax.devices()[0].device_kind.lower()
    except Exception:
        pass
    if "v7" in kind:
        return 2, 8192   # 2 TensorCores; 4 MiB/input/step << 32 MiB scoped VMEM
    if "v6" in kind:
        return 1, 8192   # single TC; plenty of room under 32 MiB scoped VMEM
    return 1, 4096       # v5e / v5p / unknown: safe under 16 MiB scoped VMEM


def mse_loss_pallas(y, d, *, block_rows=None, num_cores=None,
                    min_kernel_elems=1 << 20):
    """Computes mean((y - d)**2) with a Pallas TPU streaming reduction."""
    assert y.shape == d.shape, "y and d must have the same shape"
    n = y.size

    def_cores, def_rows = _tpu_defaults()
    if num_cores is None:
        num_cores = def_cores
    if block_rows is None:
        block_rows = def_rows

    yf = y.reshape(-1)
    df = d.reshape(-1)
    rows = n // _LANE                       # complete 128-lane rows

    # Small-input fast path: kernel dispatch + per-step overhead dominates.
    if n < min_kernel_elems or rows < _SUBLANE:
        diff = yf.astype(jnp.float32) - df.astype(jnp.float32)
        return jnp.sum(diff * diff) / jnp.float32(n)

    block_rows = max(_SUBLANE, (int(block_rows) // _SUBLANE) * _SUBLANE)

    if rows <= block_rows:
        # Single block spanning the full row range.  Keep it a multiple of 8
        # so the in-kernel sublane reshape is exact; remainder joins the tail.
        kernel_rows = (rows // _SUBLANE) * _SUBLANE
        block_rows = kernel_rows
        need_row_mask = False
    else:
        kernel_rows = rows
        need_row_mask = (kernel_rows % block_rows) != 0

    main = kernel_rows * _LANE
    if main == n:
        tail_sum = jnp.float32(0.0)
        y_main, d_main = yf, df
    else:
        # Ragged tail (< 1152 elements): plain JAX.  Replaces the old jnp.pad,
        # which copied BOTH full inputs through HBM just to fix the remainder.
        yt = yf[main:].astype(jnp.float32)
        dt = df[main:].astype(jnp.float32)
        tail_sum = jnp.sum((yt - dt) * (yt - dt))
        # TODO(synk): the prefix slice below may still copy `main` elements for
        # ragged n; a zero-copy path would need manual DMA from a pl.ANY ref.
        y_main, d_main = yf[:main], df[:main]

    y2 = y_main.reshape(kernel_rows, _LANE)
    d2 = d_main.reshape(kernel_rows, _LANE)

    acc_rows = 4 if (block_rows % (4 * _SUBLANE)) == 0 else 1

    nblocks = pl.cdiv(kernel_rows, block_rows)
    num_cores = max(1, int(num_cores))
    if nblocks % num_cores != 0:
        # Never let a grid step map past the real block range (avoids any
        # reliance on window clamping -> no OOB DMA risk, no wasted fetches).
        num_cores = 1
    blocks_per_core = nblocks // num_cores

    kernel = functools.partial(
        _sq_diff_sum_kernel,
        kernel_rows=kernel_rows,
        block_rows=block_rows,
        acc_rows=acc_rows,
        blocks_per_core=blocks_per_core,
        num_cores=num_cores,
        need_row_mask=need_row_mask,
    )

    in_spec = pl.BlockSpec((block_rows, _LANE),
                           lambda c, j: (c * blocks_per_core + j, 0))

    partials = pl.pallas_call(
        kernel,
        out_shape=jax.ShapeDtypeStruct((num_cores, acc_rows, _SUBLANE, _LANE),
                                       jnp.float32),
        grid_spec=pltpu.PrefetchScalarGridSpec(
            num_scalar_prefetch=0,
            grid=(num_cores, blocks_per_core),
            in_specs=[in_spec, in_spec],
            out_specs=pl.BlockSpec((None, acc_rows, _SUBLANE, _LANE),
                                   lambda c, j: (c, 0, 0, 0)),
        ),
        compiler_params=pltpu.CompilerParams(
            # TODO(synk): on v7x, confirm in a profile that "parallel" shards
            # this axis across the 2 TensorCores (else switch to CORE_PARALLEL).
            dimension_semantics=("parallel", "arbitrary"),
        ),
    )(y2, d2)

    # Tiny final reduce (<= num_cores * acc_rows * 1024 f32) + mean in JAX.
    return (jnp.sum(partials) + tail_sum) / jnp.float32(n)


if __name__ == "__main__":
    key = jax.random.PRNGKey(0)
    k1, k2, k3, k4 = jax.random.split(key, 4)

    # VAE-reconstruction-like shape: NCHW (batch=2, channels=4, 16x16)
    x_shape = (2, 4, 16, 16)
    y = jax.random.uniform(k1, x_shape, dtype=jnp.float32)   # reconstruction
    d = jax.random.uniform(k2, x_shape, dtype=jnp.float32)   # target
    ref = jnp.mean((y - d) ** 2)

    # 1) Default path: small n routes through the JAX fast path.
    loss_fast = jax.block_until_ready(mse_loss_pallas(y, d))
    assert jnp.allclose(loss_fast, ref, rtol=1e-5, atol=1e-6), (loss_fast, ref)

    # 2) Force the Pallas kernel on the same small shape (single full block).
    loss_k = jax.block_until_ready(mse_loss_pallas(y, d, min_kernel_elems=0))
    assert jnp.allclose(loss_k, ref, rtol=1e-5, atol=1e-6), (loss_k, ref)

    # 3) Ragged shape: exercises multi-block accumulation, the last-step row
    #    mask, and the plain-JAX lane tail (no jnp.pad copy anywhere).
    z_shape = (3, 5, 17, 13)                 # 3315 elements, not a lane multiple
    y2 = jax.random.uniform(k3, z_shape, dtype=jnp.float32)
    d2 = jax.random.uniform(k4, z_shape, dtype=jnp.float32)
    ref_r = jnp.mean((y2 - d2) ** 2)
    loss_r = jax.block_until_ready(
        mse_loss_pallas(y2, d2, block_rows=8, min_kernel_elems=0))
    assert jnp.allclose(loss_r, ref_r, rtol=1e-5, atol=1e-6), (loss_r, ref_r)

    print("KERNEL_OK")
</pallas_src>

<mosaic_0001>
module attributes {stable_mosaic.version = 11 : i64} {
  func.func @_sq_diff_sum_kernel(%arg0: i32, %arg1: i32, %arg2: memref<16x128xf32, #tpu.memory_space<vmem>>, %arg3: memref<16x128xf32, #tpu.memory_space<vmem>>, %arg4: memref<1x1x8x128xf32, #tpu.memory_space<vmem>>) attributes {dimension_semantics = [#tpu.dimension_semantics<parallel>, #tpu.dimension_semantics<arbitrary>], iteration_bounds = array<i64: 1, 1>, scalar_prefetch = 0 : i64, scratch_operands = 0 : i64, tpu.core_type = #tpu.core_type<tc>, window_params = [{transform_indices = @transform_0, window_bounds = array<i64: 16, 128>}, {transform_indices = @transform_1, window_bounds = array<i64: 16, 128>}, {transform_indices = @transform_2, window_bounds = array<i64: 1, 1, 8, 128>}]} {
    %c0_i32 = arith.constant 0 : i32
    %0 = arith.cmpi eq, %arg1, %c0_i32 : i32
    %1 = arith.extui %0 : i1 to i32
    %c0_i32_0 = arith.constant 0 : i32
    %2 = arith.cmpi ne, %1, %c0_i32_0 : i32
    scf.if %2 {
      %cst_12 = arith.constant 0.000000e+00 : f32
      %15 = vector.broadcast %cst_12 : f32 to vector<1x8x128xf32>
      %c0_13 = arith.constant 0 : index
      %c0_14 = arith.constant 0 : index
      %c0_15 = arith.constant 0 : index
      %c0_16 = arith.constant 0 : index
      %16 = vector.load %arg4[%c0_13, %c0_14, %c0_15, %c0_16] : memref<1x1x8x128xf32, #tpu.memory_space<vmem>>, vector<1x1x8x128xf32>
      %17 = vector.shape_cast %16 : vector<1x1x8x128xf32> to vector<1x8x128xf32>
      %18 = vector.shape_cast %15 : vector<1x8x128xf32> to vector<1x1x8x128xf32>
      tpu.vector_store %arg4[%c0_13, %c0_14, %c0_15, %c0_16], %18 {strides = array<i32>} : memref<1x1x8x128xf32, #tpu.memory_space<vmem>>, vector<1x1x8x128xf32>,
    } else {
    }
    %c0 = arith.constant 0 : index
    %c0_1 = arith.constant 0 : index
    %3 = vector.load %arg2[%c0, %c0_1] : memref<16x128xf32, #tpu.memory_space<vmem>>, vector<16x128xf32>
    %c0_2 = arith.constant 0 : index
    %c0_3 = arith.constant 0 : index
    %4 = vector.load %arg3[%c0_2, %c0_3] : memref<16x128xf32, #tpu.memory_space<vmem>>, vector<16x128xf32>
    %5 = arith.subf %3, %4 : vector<16x128xf32>
    %6 = arith.mulf %5, %5 : vector<16x128xf32>
    %c0_4 = arith.constant 0 : index
    %c0_5 = arith.constant 0 : index
    %c0_6 = arith.constant 0 : index
    %c0_7 = arith.constant 0 : index
    %7 = vector.load %arg4[%c0_4, %c0_5, %c0_6, %c0_7] : memref<1x1x8x128xf32, #tpu.memory_space<vmem>>, vector<1x1x8x128xf32>
    %8 = vector.shape_cast %7 : vector<1x1x8x128xf32> to vector<1x8x128xf32>
    %9 = vector.shape_cast %6 : vector<16x128xf32> to vector<2x1x8x128xf32>
    %cst = arith.constant dense<0.000000e+00> : vector<1x8x128xf32>
    %10 = vector.multi_reduction <add>, %9, %cst [0] : vector<2x1x8x128xf32> to vector<1x8x128xf32>
    %11 = arith.addf %8, %10 : vector<1x8x128xf32>
    %c0_8 = arith.constant 0 : index
    %c0_9 = arith.constant 0 : index
    %c0_10 = arith.constant 0 : index
    %c0_11 = arith.constant 0 : index
    %12 = vector.load %arg4[%c0_8, %c0_9, %c0_10, %c0_11] : memref<1x1x8x128xf32, #tpu.memory_space<vmem>>, vector<1x1x8x128xf32>
    %13 = vector.shape_cast %12 : vector<1x1x8x128xf32> to vector<1x8x128xf32>
    %14 = vector.shape_cast %11 : vector<1x8x128xf32> to vector<1x1x8x128xf32>
    tpu.vector_store %arg4[%c0_8, %c0_9, %c0_10, %c0_11], %14 {strides = array<i32>} : memref<1x1x8x128xf32, #tpu.memory_space<vmem>>, vector<1x1x8x128xf32>,
    return
  }
  func.func @transform_0(%arg0: i32, %arg1: i32) -> (i32, i32) {
    %c1_i32 = arith.constant 1 : i32
    %0 = arith.muli %arg0, %c1_i32 : i32
    %1 = arith.addi %0, %arg1 : i32
    %c0_i32 = arith.constant 0 : i32
    %c0_i32_0 = arith.constant 0 : i32
    return %1, %c0_i32 : i32, i32
  }
  func.func @transform_1(%arg0: i32, %arg1: i32) -> (i32, i32) {
    %c1_i32 = arith.constant 1 : i32
    %0 = arith.muli %arg0, %c1_i32 : i32
    %1 = arith.addi %0, %arg1 : i32
    %c0_i32 = arith.constant 0 : i32
    %c0_i32_0 = arith.constant 0 : i32
    return %1, %c0_i32 : i32, i32
  }
  func.func @transform_2(%arg0: i32, %arg1: i32) -> (i32, i32, i32, i32) {
    %c0_i32 = arith.constant 0 : i32
    %c0_i32_0 = arith.constant 0 : i32
    %c0_i32_1 = arith.constant 0 : i32
    %c0_i32_2 = arith.constant 0 : i32
    return %arg0, %c0_i32, %c0_i32_0, %c0_i32_1 : i32, i32, i32, i32
  }
}

</mosaic_0001>

<llo_original>
// kernel: tpu_custom_call.1
$region0: #{tpu_custom_call.1}
  #allocation0 [shape = 'u32[]', space=smem, size = 0x4, offset = 0x4, fixed_abs, tag = 'smem constant byte address 0x4 - core index']
  #allocation1 [shape = 'u32[144,128]{1,0:T(1,128)}', space=vmem, size = 0x12000, scoped, tag = 'internal scratch']
  %s0 = inlined_call_operand.hbm [shape: f32[16,128], index: 0, kind: input, shape index: {}]
  %s1 = inlined_call_operand.hbm [shape: f32[16,128], index: 1, kind: input, shape index: {}]
  %s2 = inlined_call_operand.hbm [shape: f32[1,1,8,128], index: 2, kind: output, shape index: {}]
  %s3 = sld [smem:[#allocation0]]
  $region30: #{tpu_custom_call.1} parent=0
    _
  %s5 = ssub.s32 1, %s3
  %s6 = scalar_select 0, %s5, %s3
  $region1: #{tpu_custom_call.1} parent=0
    #allocation2 [shape = 'u8[8192]{0}', space=vmem, size = 0x2000, scoped, tag = 'input window, operand 0, single buffered']
    #allocation3 [shape = 's32[1]{0}', space=sflag, size = 0x4, scoped, tag = 'scoped memory for tpu_custom_call.1']
    #allocation4 [shape = 's32[1]{0}', space=sflag, size = 0x4, scoped, tag = 'scoped memory for tpu_custom_call.1']
    #allocation5 [shape = 'u8[8192]{0}', space=vmem, size = 0x2000, scoped, tag = 'input window, operand 1, single buffered']
    #allocation6 [shape = 's32[1]{0}', space=sflag, size = 0x4, scoped, tag = 'scoped memory for tpu_custom_call.1']
    #allocation7 [shape = 'u8[4096]{0}', space=vmem, size = 0x1000, scoped, tag = 'output window, operand 0, single buffered']
    %7 = vsyncpa [#allocation3], 0
    %8 = vsyncpa [#allocation6], 0
    %9 = vsyncpa [#allocation4], 0
    // Predicated region
    $region2: #{tpu_custom_call.1} parent=1 // pred_check
      _
    $region3: #{tpu_custom_call.1} parent=1 // pred_check_branch
      %11 = sbr.rel (0) target = $region5
    $region4: #{tpu_custom_call.1} parent=1 // pred_region
      %s12 = sadd.s32 0, 0
      %s13 = smul.u32 2, %s12
      %s15 = ssub.s32 256, 256
      %16 = vsyncadd [#allocation3], %s15
      %s17 = smul.addr %s13, 128
      %s18 = scalar_lea.hbm %s0, %s17
      %s19 = sshll.u32 [#allocation2], 4
      %s20 = int_to_ptr.vmem [resolvable:$true] %s19
      %25 = dma.hbm_to_vmem [thread:$0]  %s18, 256, %s20, [#allocation3], 128, 128, 8
    $region5: #{tpu_custom_call.1} parent=1 // pred_fallthru
      _
    // Predicated region
    $region6: #{tpu_custom_call.1} parent=1 // pred_check
      _
    $region7: #{tpu_custom_call.1} parent=1 // pred_check_branch
      %27 = sbr.rel (0) target = $region9
    $region8: #{tpu_custom_call.1} parent=1 // pred_region
      %s28 = sadd.s32 0, 0
      %s29 = smul.u32 2, %s28
      %s31 = ssub.s32 256, 256
      %32 = vsyncadd [#allocation6], %s31
      %s33 = smul.addr %s29, 128
      %s34 = scalar_lea.hbm %s1, %s33
      %s35 = sshll.u32 [#allocation5], 4
      %s36 = int_to_ptr.vmem [resolvable:$true] %s35
      %41 = dma.hbm_to_vmem [thread:$0]  %s34, 256, %s36, [#allocation6], 128, 128, 8
    $region9: #{tpu_custom_call.1} parent=1 // pred_fallthru
      _
    // Predicated region
    $region10: #{tpu_custom_call.1} parent=1 // pred_check
      _
    $region11: #{tpu_custom_call.1} parent=1 // pred_check_branch
      %43 = sbr.rel (0) target = $region13
    $region12: #{tpu_custom_call.1} parent=1 // pred_region
      %44 = dma.done [#allocation3], 256
    $region13: #{tpu_custom_call.1} parent=1 // pred_fallthru
      _
    // Predicated region
    $region14: #{tpu_custom_call.1} parent=1 // pred_check
      _
    $region15: #{tpu_custom_call.1} parent=1 // pred_check_branch
      %46 = sbr.rel (0) target = $region17
    $region16: #{tpu_custom_call.1} parent=1 // pred_region
      %47 = dma.done [#allocation6], 256
    $region17: #{tpu_custom_call.1} parent=1 // pred_fallthru
      _
    %s48 = sadd.s32 0, 0
    %s49 = smul.u32 2, %s48
    %s50 = sadd.s32 0, 0
    %s51 = smul.u32 2, %s50
    %p52 = scmp.eq.s32.totalorder 0, 0
    // Predicated region
    $region18: #{tpu_custom_call.1} parent=1 // pred_check
      %p53 = pneg %p52
    $region19: #{tpu_custom_call.1} parent=1 // pred_check_branch
      %55 = sbr.rel (%p53) target = $region21
    $region20: #{tpu_custom_call.1} parent=1 // pred_region
      %56 = vst [vmem:[#allocation7] sm:$0xff] 0.0
    $region21: #{tpu_custom_call.1} parent=1 // pred_fallthru
      _
    %v57 = vld [vmem:[#allocation2] sm:$0xff]
    %v58 = vld [vmem:[#allocation2 + $0x8] sm:$0xff]
    %v59 = vld [vmem:[#allocation5] sm:$0xff]
    %v60 = vld [vmem:[#allocation5 + $0x8] sm:$0xff]
    %v61 = vsub.f32 %v57, %v59
    %v62 = vsub.f32 %v58, %v60
    %v63 = vmul.f32 %v61, %v61
    %v64 = vmul.f32 %v62, %v62
    %v65 = vld [vmem:[#allocation7] sm:$0xff]
    %v66 = vadd.f32 %v63, %v64
    %v67 = vadd.f32 %v65, %v66
    %68 = vst [vmem:[#allocation7] sm:$0xff] %v67
    // Predicated region
    $region22: #{tpu_custom_call.1} parent=1 // pred_check
      _
    $region23: #{tpu_custom_call.1} parent=1 // pred_check_branch
      %70 = sbr.rel (0) target = $region25
    $region24: #{tpu_custom_call.1} parent=1 // pred_region
      %s72 = ssub.s32 128, 128
      %73 = vsyncadd [#allocation4], %s72
      %s75 = sshll.u32 [#allocation7], 4
      %s76 = int_to_ptr.vmem [resolvable:$true] %s75
      %78 = dma.vmem_to_hbm [thread:$0]  %s76, 128, %s2, [#allocation4]
    $region25: #{tpu_custom_call.1} parent=1 // pred_fallthru
      _
    // Predicated region
    $region26: #{tpu_custom_call.1} parent=1 // pred_check
      _
    $region27: #{tpu_custom_call.1} parent=1 // pred_check_branch
      %80 = sbr.rel (0) target = $region29
    $region28: #{tpu_custom_call.1} parent=1 // pred_region
      %81 = dma.done [#allocation4], 128
    $region29: #{tpu_custom_call.1} parent=1 // pred_fallthru
      _
    %82 = vsyncpa [#allocation3], 1
    %83 = vsyncpa [#allocation6], 1
    %84 = vsyncpa [#allocation4], 1

</llo_original>
